<compile_context>
chip_gen: v5e
topology: v5e:2x2
jax: 0.10.0
libtpu: 0.0.40
codegen_flags: <defaults>
</compile_context>

<pallas_src>
import functools

import jax
import jax.numpy as jnp
from jax.experimental import pallas as pl
from jax.experimental.pallas import tpu as pltpu


# --------------------------------------------------------------------------
# Kernels
# --------------------------------------------------------------------------
def _fused_pool_kernel(x_ref, o_ref):
    # x_ref: (ct, th, 2*W) -- each row is [input row 2r | input row 2r+1]
    # o_ref: (ct, th, W//2)
    x = x_ref[...]
    w = x.shape[-1] // 2
    hp = jnp.maximum(x[:, :, :w], x[:, :, w:])                  # H-pair max (contiguous halves)
    o_ref[...] = jnp.maximum(hp[:, :, 0::2], hp[:, :, 1::2])    # W-pair max (stride-2 lanes)


def _hpool_kernel(x_ref, o_ref):
    # Fallback: H-pair max only.  x_ref: (ct, th, 2*W), o_ref: (ct, th, W)
    x = x_ref[...]
    w = x.shape[-1] // 2
    o_ref[...] = jnp.maximum(x[:, :, :w], x[:, :, w:])


# --------------------------------------------------------------------------
# pallas_call builders
# --------------------------------------------------------------------------
def _compiler_params(vmem_limit):
    return pltpu.CompilerParams(
        dimension_semantics=("parallel", "parallel"),
        vmem_limit_bytes=int(vmem_limit))


def _fused_pool_call(x2, ct, th, vmem_limit):
    NC, Hh, W2 = x2.shape
    Wo = W2 // 4
    itemsize = jnp.dtype(x2.dtype).itemsize
    cost = pl.CostEstimate(
        flops=3 * NC * Hh * Wo,
        transcendentals=0,
        bytes_accessed=(NC * Hh * W2 + NC * Hh * Wo) * itemsize)
    return pl.pallas_call(
        _fused_pool_kernel,
        out_shape=jax.ShapeDtypeStruct((NC, Hh, Wo), x2.dtype),
        grid=(pl.cdiv(NC, ct), pl.cdiv(Hh, th)),
        in_specs=[pl.BlockSpec((ct, th, W2), lambda c, h: (c, h, 0))],
        out_specs=pl.BlockSpec((ct, th, Wo), lambda c, h: (c, h, 0)),
        compiler_params=_compiler_params(vmem_limit),
        cost_estimate=cost,
    )(x2)


def _split_pool_call(x2, ct, th, vmem_limit):
    # Only used if the fused kernel does not lower on this Mosaic build.
    NC, Hh, W2 = x2.shape
    W = W2 // 2
    itemsize = jnp.dtype(x2.dtype).itemsize
    cost = pl.CostEstimate(
        flops=NC * Hh * W,
        transcendentals=0,
        bytes_accessed=(NC * Hh * W2 + NC * Hh * W) * itemsize)
    y = pl.pallas_call(
        _hpool_kernel,
        out_shape=jax.ShapeDtypeStruct((NC, Hh, W), x2.dtype),
        grid=(pl.cdiv(NC, ct), pl.cdiv(Hh, th)),
        in_specs=[pl.BlockSpec((ct, th, W2), lambda c, h: (c, h, 0))],
        out_specs=pl.BlockSpec((ct, th, W), lambda c, h: (c, h, 0)),
        compiler_params=_compiler_params(vmem_limit),
        cost_estimate=cost,
    )(x2)
    # W-pair max as one fused XLA op (two strided reads + max).
    return jnp.maximum(y[:, :, 0::2], y[:, :, 1::2])


# --------------------------------------------------------------------------
# Probe / tiling helpers
# --------------------------------------------------------------------------
@functools.lru_cache(maxsize=None)
def _fused_kernel_compiles(NC, Hh, W2, ct, th, dtype_name, vmem_limit):
    """Compile-only probe (cached per shape/dtype/tiling, runs at trace time
    even under an outer jit, executes nothing on device)."""
    try:
        x = jax.ShapeDtypeStruct((NC, Hh, W2), jnp.dtype(dtype_name))
        jax.jit(lambda a: _fused_pool_call(a, ct, th, vmem_limit)).lower(x).compile()
        return True
    except Exception:
        # Compile/lowering failure only; runtime numerics are never masked here.
        return False


def _vmem_capacity_bytes():
    try:
        cap = int(getattr(pltpu.get_tpu_info(), "vmem_capacity_bytes", 0))
        if cap > 0:
            return cap
    except Exception:
        pass
    return 64 * 1024 * 1024   # conservative default (v7x physical VMEM per core)


def _choose_tiles(NC, Hh, W2, itemsize, target_in_bytes):
    """Pick (channel_tile, row_tile) for the (NC, Hh, W2) view: ~target-sized
    input blocks, sublane dim a multiple of 8 (or full), and >= 2 grid steps."""
    row_bytes = max(1, W2 * itemsize)
    img_bytes = Hh * row_bytes
    if img_bytes <= target_in_bytes:
        th = Hh                                                   # full image rows per block
        ct = max(1, min(NC, target_in_bytes // img_bytes))
    else:
        ct = 1
        th = min(Hh, max(8, (target_in_bytes // row_bytes) // 8 * 8))
    # Guarantee >= 2 grid steps when possible (megacore sharding + pipelining).
    if pl.cdiv(NC, ct) * pl.cdiv(Hh, th) < 2:
        if NC > 1:
            ct = -(-NC // 2)                                      # ceil(NC / 2)
        elif th == Hh and Hh >= 16 and Hh % 16 == 0:
            th = Hh // 2
    return int(ct), int(th)


# --------------------------------------------------------------------------
# Public wrapper
# --------------------------------------------------------------------------
def maxpool2d_2x2(x_nchw):
    """Equivalent of torch.nn.functional.max_pool2d(x, 2) for NCHW inputs."""
    N, C, H, W = x_nchw.shape
    # F.max_pool2d(x, 2) floors odd spatial dims (drops the last row/column).
    if (H % 2) or (W % 2):
        x_nchw = x_nchw[:, :, : H - (H % 2), : W - (W % 2)]
        H -= H % 2
        W -= W % 2
    NC, Ho, Wo = N * C, H // 2, W // 2

    # Free contiguous view: row r of image i = [input row 2r | input row 2r+1].
    x2 = x_nchw.reshape(NC, Ho, 2 * W)

    itemsize = jnp.dtype(x_nchw.dtype).itemsize
    cap = _vmem_capacity_bytes()
    # Double-buffered footprint ~= 2*(in + out) ~= 2.5*in; keep <= ~60% of the
    # requested VMEM limit, limit <= half of physical VMEM.
    vmem_limit = min(cap // 2, 64 * 1024 * 1024)
    target_in = min(8 << 20, int(vmem_limit * 0.6 / 2.5))
    ct, th = _choose_tiles(NC, Ho, 2 * W, itemsize, target_in)

    if _fused_kernel_compiles(NC, Ho, 2 * W, ct, th,
                              jnp.dtype(x_nchw.dtype).name, int(vmem_limit)):
        out = _fused_pool_call(x2, ct, th, vmem_limit)
    else:
        out = _split_pool_call(x2, ct, th, vmem_limit)
    return out.reshape(N, C, Ho, Wo)


# --------------------------------------------------------------------------
# Self-test
# --------------------------------------------------------------------------
if __name__ == "__main__":
    key = jax.random.PRNGKey(0)
    N, C, H, W = 2, 4, 16, 16
    x = jax.random.normal(key, (N, C, H, W), dtype=jnp.float32)

    out = jax.block_until_ready(maxpool2d_2x2(x))

    # reference: max over non-overlapping 2x2 windows
    ref = jnp.max(x.reshape(N, C, H // 2, 2, W // 2, 2), axis=(3, 5))
    assert out.shape == (N, C, H // 2, W // 2), out.shape
    assert out.dtype == x.dtype, out.dtype
    assert jnp.allclose(out, ref), "mismatch vs reference 2x2 max-pool"

    # odd spatial dims follow F.max_pool2d's floor behaviour
    x_odd = jax.random.normal(jax.random.PRNGKey(1), (2, 3, 9, 7), dtype=jnp.float32)
    out_odd = jax.block_until_ready(maxpool2d_2x2(x_odd))
    ref_odd = jnp.max(x_odd[:, :, :8, :6].reshape(2, 3, 4, 2, 3, 2), axis=(3, 5))
    assert out_odd.shape == (2, 3, 4, 3), out_odd.shape
    assert jnp.allclose(out_odd, ref_odd), "mismatch vs reference (odd dims)"

    print("KERNEL_OK")
</pallas_src>

<mosaic_0001>
module attributes {stable_mosaic.version = 11 : i64} {
  func.func @_hpool_kernel(%arg0: i32, %arg1: i32, %arg2: memref<4x8x32xf32, #tpu.memory_space<vmem>>, %arg3: memref<4x8x16xf32, #tpu.memory_space<vmem>>) attributes {dimension_semantics = [#tpu.dimension_semantics<parallel>, #tpu.dimension_semantics<parallel>], iteration_bounds = array<i64: 2, 1>, scalar_prefetch = 0 : i64, scratch_operands = 0 : i64, tpu.core_type = #tpu.core_type<tc>, window_params = [{transform_indices = @transform_0, window_bounds = array<i64: 4, 8, 32>}, {transform_indices = @transform_1, window_bounds = array<i64: 4, 8, 16>}]} {
    %c0 = arith.constant 0 : index
    %c0_0 = arith.constant 0 : index
    %c0_1 = arith.constant 0 : index
    %0 = vector.load %arg2[%c0, %c0_0, %c0_1] : memref<4x8x32xf32, #tpu.memory_space<vmem>>, vector<4x8x32xf32>
    %1 = vector.extract_strided_slice %0 {offsets = [0, 0, 0], sizes = [4, 8, 16], strides = [1, 1, 1]} : vector<4x8x32xf32> to vector<4x8x16xf32>
    %2 = vector.extract_strided_slice %0 {offsets = [0, 0, 16], sizes = [4, 8, 16], strides = [1, 1, 1]} : vector<4x8x32xf32> to vector<4x8x16xf32>
    %3 = arith.maximumf %1, %2 : vector<4x8x16xf32>
    %c0_2 = arith.constant 0 : index
    %c0_3 = arith.constant 0 : index
    %c0_4 = arith.constant 0 : index
    %4 = vector.load %arg3[%c0_2, %c0_3, %c0_4] : memref<4x8x16xf32, #tpu.memory_space<vmem>>, vector<4x8x16xf32>
    tpu.vector_store %arg3[%c0_2, %c0_3, %c0_4], %3 {strides = array<i32>} : memref<4x8x16xf32, #tpu.memory_space<vmem>>, vector<4x8x16xf32>,
    return
  }
  func.func @transform_0(%arg0: i32, %arg1: i32) -> (i32, i32, i32) {
    %c0_i32 = arith.constant 0 : i32
    %c0_i32_0 = arith.constant 0 : i32
    return %arg0, %arg1, %c0_i32 : i32, i32, i32
  }
  func.func @transform_1(%arg0: i32, %arg1: i32) -> (i32, i32, i32) {
    %c0_i32 = arith.constant 0 : i32
    %c0_i32_0 = arith.constant 0 : i32
    return %arg0, %arg1, %c0_i32 : i32, i32, i32
  }
}

</mosaic_0001>

<llo_original>
// kernel: tpu_custom_call.1
$region0: #{tpu_custom_call.1}
  #allocation0 [shape = 'u32[]', space=smem, size = 0x4, offset = 0x4, fixed_abs, tag = 'smem constant byte address 0x4 - core index']
  #allocation1 [shape = 'u32[72,128]{1,0:T(1,128)}', space=vmem, size = 0x9000, scoped, tag = 'internal scratch']
  %s0 = inlined_call_operand.hbm [shape: f32[8,8,32], index: 0, kind: input, shape index: {}]
  %s1 = inlined_call_operand.hbm [shape: f32[8,8,16], index: 1, kind: output, shape index: {}]
  %s2 = sld [smem:[#allocation0]]
  $region41: #{tpu_custom_call.1} parent=0
    _
  %s4 = ssub.s32 1, %s2
  %s5 = scalar_select 0, %s4, %s2
  $region1: #{tpu_custom_call.1} parent=0
    #allocation2 [shape = 'u8[32768]{0}', space=vmem, size = 0x8000, scoped, tag = 'input window, operand 0']
    #allocation3 [shape = 's32[2]{0}', space=sflag, size = 0x8, scoped, tag = 'scoped memory for tpu_custom_call.1']
    #allocation4 [shape = 's32[2]{0}', space=sflag, size = 0x8, scoped, tag = 'scoped memory for tpu_custom_call.1']
    #allocation5 [shape = 'u8[32768]{0}', space=vmem, size = 0x8000, scoped, tag = 'output window, operand 0']
    %6 = vsyncpa [#allocation3], 0
    %s7 = scalar_lea.sflag [#allocation3], 1
    %8 = vsyncpa %s7, 0
    %9 = vsyncpa [#allocation4], 0
    %s10 = scalar_lea.sflag [#allocation4], 1
    %11 = vsyncpa %s10, 0
    loop: start=0, step=1, limit=4
    $region2: #{tpu_custom_call.1} parent=1 // loop_pre_header
      _
    $region3: #{tpu_custom_call.1} parent=1 // loop_header
      %s13 = sphi 0, %s17
      %p14 = scmp.ge.s32.totalorder %s13, 4
      %s20 = sphi 0, %s32
      %s21 = sphi 0, %s28
      %s22 = sphi 0, %s20
      %s23 = sphi 0, %s21
      %s24 = sphi 0, %s22
      %s25 = sphi 0, %s23
      %s37 = sphi 0, %s39
      %s40 = sphi 0, %s37
      %s41 = sphi 0, %s40
      %s57 = sphi 0, %s41
      %s65 = sphi 0, %s67
      %s68 = sphi 0, %s65
      %s69 = sphi 0, %s68
      %s85 = sphi 0, %s69
    $region4: #{tpu_custom_call.1} parent=1 // loop_header_branch
      %16 = sbr.rel (%p14) target = $region8
    $region5: #{tpu_custom_call.1} parent=1 // loop_body
      %s18 = ssub.s32 %s13, 1
      %s19 = ssub.s32 %s13, 2
      %s26 = sadd.s32 1, %s21
      %p27 = scmp.ge.s32.totalorder %s26, 1
      %s28 = scalar_select %p27, 0, %s26
      %s29 = sadd.s32 1, %s20
      %s30 = scalar_select %p27, %s29, %s20
      %p31 = scmp.ge.s32.totalorder %s30, 2
      %s32 = scalar_select %p31, 0, %s30
      %s33 = ssub.s32 %s20, %s32
      %s34 = ssub.s32 %s21, %s28
      %s35 = sor.u32 %s33, %s34
      %p36 = scmp.eq.s32.totalorder %s35, 0
      %s38 = sadd.s32 %s37, 1
      %s39 = scalar_select %p36, %s37, %s38
      %p42 = pneg %p36
      %p43 = scmp.eq.s32.totalorder %s13, 1
      %p44 = por %p42, %p43
      %p45 = scmp.ne.s32.totalorder %s37, %s40
      %p46 = scmp.eq.s32.totalorder %s13, 0
      %p47 = por %p45, %p46
      %p48 = scmp.ne.s32.totalorder %s37, %s40
      %p49 = scmp.eq.s32.totalorder %s18, 1
      %p50 = por %p48, %p49
      %p51 = scmp.ne.s32.totalorder %s40, %s41
      %p52 = scmp.eq.s32.totalorder %s18, 0
      %p53 = por %p51, %p52
      %p54 = scmp.ne.s32.totalorder %s40, %s41
      %p55 = scmp.eq.s32.totalorder %s19, 1
      %p56 = por %p54, %p55
      %p58 = scmp.ne.s32.totalorder %s41, %s57
      %p59 = scmp.eq.s32.totalorder %s19, 0
      %p60 = por %p58, %p59
      %s61 = ssub.s32 %s20, %s32
      %s62 = ssub.s32 %s21, %s28
      %s63 = sor.u32 %s61, %s62
      %p64 = scmp.eq.s32.totalorder %s63, 0
      %s66 = sadd.s32 %s65, 1
      %s67 = scalar_select %p64, %s65, %s66
      %p70 = pneg %p64
      %p71 = scmp.eq.s32.totalorder %s13, 1
      %p72 = por %p70, %p71
      %p73 = scmp.ne.s32.totalorder %s65, %s68
      %p74 = scmp.eq.s32.totalorder %s13, 0
      %p75 = por %p73, %p74
      %p76 = scmp.ne.s32.totalorder %s65, %s68
      %p77 = scmp.eq.s32.totalorder %s18, 1
      %p78 = por %p76, %p77
      %p79 = scmp.ne.s32.totalorder %s68, %s69
      %p80 = scmp.eq.s32.totalorder %s18, 0
      %p81 = por %p79, %p80
      %p82 = scmp.ne.s32.totalorder %s68, %s69
      %p83 = scmp.eq.s32.totalorder %s19, 1
      %p84 = por %p82, %p83
      %p86 = scmp.ne.s32.totalorder %s69, %s85
      %p87 = scmp.eq.s32.totalorder %s19, 0
      %p88 = por %p86, %p87
      %p89 = scmp.le.s32.totalorder 1, %s13
      %p90 = scmp.lt.s32.totalorder %s13, 3
      %p91 = pnand %p89, %p90
      %p92 = pneg %p91
      // Predicated region
      $region9: #{tpu_custom_call.1} parent=5 // pred_check
        _
      $region10: #{tpu_custom_call.1} parent=5 // pred_check_branch
        %94 = sbr.rel (%p91) target = $region12
      $region11: #{tpu_custom_call.1} parent=5 // pred_region
        %s95 = ssub.s32 %s13, 1
      $region12: #{tpu_custom_call.1} parent=5 // pred_fallthru
        _
      %p96 = scmp.lt.s32.totalorder %s13, 2
      // Predicated region
      $region13: #{tpu_custom_call.1} parent=5 // pred_check
        %p97 = pneg %p96
      $region14: #{tpu_custom_call.1} parent=5 // pred_check_branch
        %99 = sbr.rel (%p97) target = $region16
      $region15: #{tpu_custom_call.1} parent=5 // pred_region
        // Predicated region
        $region17: #{tpu_custom_call.1} parent=15 // pred_check
          %p100 = pneg %p47
        $region18: #{tpu_custom_call.1} parent=15 // pred_check_branch
          %102 = sbr.rel (%p100) target = $region20
        $region19: #{tpu_custom_call.1} parent=15 // pred_region
          %s103 = sand.u32 %s37, 1
          %s104 = scalar_lea.sflag [#allocation3], %s103
          %s105 = sand.u32 %s37, 1
          %s106 = smul.addr %s105, 32
          %s107 = scalar_lea.vmem [#allocation2], %s106
          %s108 = smul.u32 4, %s20
          %110 = vsyncadd %s104, 0
          %s111 = sadd.s32 %s21, %s108
          %s112 = smul.addr %s111, 8
          %s113 = scalar_lea.hbm %s0, %s112
          %s114 = sshll.u32 %s113, 4
          %s115 = int_to_ptr.hbm [resolvable:$true] %s114
          %s116 = sshll.u32 %s107, 4
          %s117 = int_to_ptr.vmem [resolvable:$true] %s116
          %122 = dma.hbm_to_vmem [thread:$0]  %s115, 512, %s117, %s104, 128, 128, 8
        $region20: #{tpu_custom_call.1} parent=15 // pred_fallthru
          _
      $region16: #{tpu_custom_call.1} parent=5 // pred_fallthru
        _
      %p123 = scmp.le.s32.totalorder 1, %s13
      %p124 = scmp.lt.s32.totalorder %s13, 3
      %p125 = pnand %p123, %p124
      %p126 = pneg %p125
      // Predicated region
      $region21: #{tpu_custom_call.1} parent=5 // pred_check
        _
      $region22: #{tpu_custom_call.1} parent=5 // pred_check_branch
        %128 = sbr.rel (%p125) target = $region24
      $region23: #{tpu_custom_call.1} parent=5 // pred_region
        %s129 = ssub.s32 %s13, 1
        %s130 = sand.u32 %s40, 1
        %s131 = scalar_lea.sflag [#allocation3], %s130
        %s132 = sand.u32 %s40, 1
        %s133 = smul.addr %s132, 32
        %s134 = scalar_lea.vmem [#allocation2], %s133
        // Predicated region
        $region25: #{tpu_custom_call.1} parent=23 // pred_check
          %p135 = pneg %p53
        $region26: #{tpu_custom_call.1} parent=23 // pred_check_branch
          %137 = sbr.rel (%p135) target = $region28
        $region27: #{tpu_custom_call.1} parent=23 // pred_region
          %139 = dma.done %s131, 512
        $region28: #{tpu_custom_call.1} parent=23 // pred_fallthru
          _
        %s140 = sand.u32 %s40, 1
        %s141 = scalar_lea.sflag [#allocation3], %s140
        %s142 = sand.u32 %s40, 1
        %s143 = smul.addr %s142, 32
        %s144 = scalar_lea.vmem [#allocation2], %s143
        %p145 = pneg %p53
        %p146 = pneg %p50
        %p147 = pneg %p81
        %p148 = pneg %p78
        %s149 = sand.u32 %s68, 1
        %s150 = scalar_lea.sflag [#allocation4], %s149
        %s151 = sand.u32 %s68, 1
        %s152 = smul.addr %s151, 32
        %s153 = scalar_lea.vmem [#allocation5], %s152
        %s154 = smul.u32 4, %s22
        %s155 = smul.u32 4, %s22
        %v156 = vld [vmem:[%s134] sm:$0xff]
        %v157 = vld [vmem:[%s134 + $0x8] sm:$0xff]
        %v158 = vld [vmem:[%s134 + $0x10] sm:$0xff]
        %v159 = vld [vmem:[%s134 + $0x18] sm:$0xff]
        %164 = vrot.lane.b32.xlu0 %v156, 112
        %v165 = vpop.permute.xlu0 %164
        %166 = vrot.lane.b32.xlu0 %v157, 112
        %v167 = vpop.permute.xlu0 %166
        %168 = vrot.lane.b32.xlu0 %v158, 112
        %v169 = vpop.permute.xlu0 %168
        %170 = vrot.lane.b32.xlu0 %v159, 112
        %v171 = vpop.permute.xlu0 %170
        %v176 = vmax.f32 %v156, %v165
        %v177 = vmax.f32 %v157, %v167
        %v178 = vmax.f32 %v158, %v169
        %v179 = vmax.f32 %v159, %v171
        %vm180 = vcmask 130048
        %181 = vst.msk [vmem:[%s153] sm:$0xff] %vm180, %v176
        %182 = vst.msk [vmem:[%s153 + $0x8] sm:$0xff] %vm180, %v177
        %183 = vst.msk [vmem:[%s153 + $0x10] sm:$0xff] %vm180, %v178
        %184 = vst.msk [vmem:[%s153 + $0x18] sm:$0xff] %vm180, %v179
        %s185 = sand.u32 %s68, 1
        %s186 = scalar_lea.sflag [#allocation4], %s185
        %s187 = sand.u32 %s68, 1
        %s188 = smul.addr %s187, 32
        %s189 = scalar_lea.vmem [#allocation5], %s188
        // Predicated region
        $region29: #{tpu_custom_call.1} parent=23 // pred_check
          %p190 = pneg %p78
        $region30: #{tpu_custom_call.1} parent=23 // pred_check_branch
          %192 = sbr.rel (%p190) target = $region32
        $region31: #{tpu_custom_call.1} parent=23 // pred_region
          %s193 = smul.u32 4, %s22
          %195 = vsyncadd %s186, 0
          %s196 = sadd.s32 %s23, %s193
          %s197 = smul.addr %s196, 8
          %s198 = scalar_lea.hbm %s1, %s197
          %s199 = sshll.u32 %s189, 4
          %s200 = int_to_ptr.vmem [resolvable:$true] %s199
          %s201 = sshll.u32 %s198, 4
          %s202 = int_to_ptr.hbm [resolvable:$true] %s201
          %207 = dma.vmem_to_hbm [thread:$0]  %s200, 512, %s202, %s186, 128, 128, 8
        $region32: #{tpu_custom_call.1} parent=23 // pred_fallthru
          _
      $region24: #{tpu_custom_call.1} parent=5 // pred_fallthru
        _
      %p208 = scmp.le.s32.totalorder 2, %s13
      // Predicated region
      $region33: #{tpu_custom_call.1} parent=5 // pred_check
        %p209 = pneg %p208
      $region34: #{tpu_custom_call.1} parent=5 // pred_check_branch
        %211 = sbr.rel (%p209) target = $region36
      $region35: #{tpu_custom_call.1} parent=5 // pred_region
        %s212 = ssub.s32 %s13, 2
        // Predicated region
        $region37: #{tpu_custom_call.1} parent=35 // pred_check
          %p213 = pneg %p84
        $region38: #{tpu_custom_call.1} parent=35 // pred_check_branch
          %215 = sbr.rel (%p213) target = $region40
        $region39: #{tpu_custom_call.1} parent=35 // pred_region
          %s216 = sand.u32 %s69, 1
          %s217 = scalar_lea.sflag [#allocation4], %s216
          %s218 = sand.u32 %s69, 1
          %s219 = smul.addr %s218, 32
          %s220 = scalar_lea.vmem [#allocation5], %s219
          %222 = dma.done %s217, 512
        $region40: #{tpu_custom_call.1} parent=35 // pred_fallthru
          _
      $region36: #{tpu_custom_call.1} parent=5 // pred_fallthru
        _
    $region6: #{tpu_custom_call.1} parent=1 // loop_footer
      %s17 = sadd.s32 1, %s13
    $region7: #{tpu_custom_call.1} parent=1 // loop_footer_branch
      %12 = sbr.rel target = $region3
    $region8: #{tpu_custom_call.1} parent=1 // loop_exit
      _
    %223 = vsyncpa [#allocation3], 1
    %s224 = scalar_lea.sflag [#allocation3], 1
    %225 = vsyncpa %s224, 1
    %226 = vsyncpa [#allocation4], 1
    %s227 = scalar_lea.sflag [#allocation4], 1
    %228 = vsyncpa %s227, 1

</llo_original>
